<compile_context>
chip_gen: v5e
topology: v5e:2x2
jax: 0.10.0
libtpu: 0.0.40
codegen_flags: <defaults>
</compile_context>

<pallas_src>
from enum import Enum
from functools import partial

import jax
import jax.numpy as jnp
from jax.experimental import pallas as pl
from jax.experimental.pallas import tpu as pltpu

LANE = 128
SUBLANE = 8


def _round_up(x, m):
    return ((x + m - 1) // m) * m


class FeatureType(str, Enum):
    ENCODER = "encoder"
    DECODER = "decoder"


# ---------------------------------------------------------------------------
# Pallas kernel: fused 3x3 / stride-2 conv + bias + ReLU on one image.
#
#   p00..p11 : (1, Ho+1, Wo+1, Cp)   space-to-depth phases of the zero-padded
#                                    NHWC input (phase (a,b) = xpad[:, a::2, b::2, :])
#   w_ref    : (9, Cp, Coutp)        per-tap weight matrices (channel padded)
#   b_ref    : (1, Coutp)            bias (channel padded)
#   o_ref    : (1, Ho, Wo, Coutp)    lane-dense output (Coutp % 128 == 0)
#
# Tap (dh, dw) of output pixel (ho, wo) lives at phase[(dh%2, dw%2)][ho+dh//2,
# wo+dw//2], so each tap is a contiguous (Wo, Cp) row-slice of a phase and the
# conv becomes 9 accumulated (Wo, Cp) @ (Cp, Coutp) MXU dots per output row.
# ---------------------------------------------------------------------------
def _conv3x3_s2_kernel(p00, p01, p10, p11, w_ref, b_ref, o_ref):
    _, Ho, Wo, Coutp = o_ref.shape
    phases = (p00, p01, p10, p11)

    @pl.loop(0, Ho)
    def _row(ho):
        acc = jnp.zeros((Wo, Coutp), jnp.float32)
        for t in range(9):                       # static unroll over the 9 taps
            dh, dw = t // 3, t % 3
            ph = phases[(dh % 2) * 2 + (dw % 2)]
            row = ph[0, ho + dh // 2, pl.ds(dw // 2, Wo), :]          # (Wo, Cp)
            acc = acc + jnp.dot(row, w_ref[t],
                                preferred_element_type=jnp.float32)
        o_ref[0, ho, :, :] = jnp.maximum(acc + b_ref[...], 0.0).astype(o_ref.dtype)


def _conv3x3_s2_relu_nhwc(x_nhwc, weight_oihw, bias, cin_real):
    """relu(conv2d(x, w, b, stride=2, padding=1)) with channel-last tensors.

    x_nhwc : (N, H, W, Cp_in) with real channels in [:cin_real], rest zero.
    Returns (N, H//2, W//2, Coutp) with real channels in [:Cout], rest zero.
    """
    N, H, W, Cp_in = x_nhwc.shape
    assert H % 2 == 0 and W % 2 == 0, "stride-2 encoder expects even spatial dims"
    Cout = weight_oihw.shape[0]
    Coutp = _round_up(Cout, LANE)
    Ho, Wo = H // 2, W // 2

    # (Cout, Cin, 3, 3) -> (9, Cp_in, Coutp): tap-major, zero-padded channels.
    w9 = jnp.transpose(weight_oihw, (2, 3, 1, 0)).reshape(9, cin_real, Cout)
    w9 = jnp.pad(w9, ((0, 0), (0, Cp_in - cin_real), (0, Coutp - Cout)))
    b = jnp.pad(bias, (0, Coutp - Cout)).reshape(1, Coutp)

    # Zero-pad spatially (pad=1) and split into the 4 stride-2 phases.  This is
    # ~1x the input bytes (vs 9x for an explicit im2col patch matrix).
    xp = jnp.pad(x_nhwc, ((0, 0), (1, 1), (1, 1), (0, 0)))
    p00 = xp[:, 0::2, 0::2, :]
    p01 = xp[:, 0::2, 1::2, :]
    p10 = xp[:, 1::2, 0::2, :]
    p11 = xp[:, 1::2, 1::2, :]          # each (N, Ho+1, Wo+1, Cp_in)

    phase_spec = pl.BlockSpec((1, Ho + 1, Wo + 1, Cp_in), lambda n: (n, 0, 0, 0))

    flops = 2 * N * Ho * Wo * 9 * Cp_in * Coutp
    bytes_accessed = 4 * (4 * N * (Ho + 1) * (Wo + 1) * Cp_in
                          + 9 * Cp_in * Coutp + Coutp
                          + N * Ho * Wo * Coutp)

    out = pl.pallas_call(
        _conv3x3_s2_kernel,
        out_shape=jax.ShapeDtypeStruct((N, Ho, Wo, Coutp), jnp.float32),
        grid_spec=pltpu.PrefetchScalarGridSpec(
            num_scalar_prefetch=0,
            grid=(N,),
            in_specs=[phase_spec, phase_spec, phase_spec, phase_spec,
                      pl.BlockSpec((9, Cp_in, Coutp), lambda n: (0, 0, 0)),
                      pl.BlockSpec((1, Coutp), lambda n: (0, 0))],
            out_specs=pl.BlockSpec((1, Ho, Wo, Coutp), lambda n: (n, 0, 0, 0)),
        ),
        compiler_params=pltpu.CompilerParams(
            dimension_semantics=("parallel",)),
        cost_estimate=pl.CostEstimate(flops=int(flops), transcendentals=0,
                                      bytes_accessed=int(bytes_accessed)),
    )(p00, p01, p10, p11, w9, b)
    return out, Cout


# ---------------------------------------------------------------------------
# Synthetic "SMP encoder" + feature extractor
# ---------------------------------------------------------------------------
def init_encoder_params(key, in_channels=3, stage_channels=(16, 32)):
    params = []
    cin = in_channels
    for cout in stage_channels:
        key, kw, kb = jax.random.split(key, 3)
        w = jax.random.normal(kw, (cout, cin, 3, 3), jnp.float32) * 0.1
        b = jax.random.normal(kb, (cout,), jnp.float32) * 0.01
        params.append((w, b))
        cin = cout
    return params


def encoder_features(x_nchw, params, position):
    """Encoder feature `position` (SMP convention: feature 0 is the raw input)."""
    if position == 0:
        return x_nchw

    # NCHW -> NHWC once; everything stays channel-last across stages.
    h = jnp.transpose(x_nchw, (0, 2, 3, 1))
    cin_real = h.shape[-1]
    cin_pad = _round_up(cin_real, SUBLANE)
    if cin_pad != cin_real:            # align the contraction dim (3 -> 8)
        h = jnp.pad(h, ((0, 0), (0, 0), (0, 0), (0, cin_pad - cin_real)))

    feat = None
    cout = cin_real
    for stage, (w, b) in enumerate(params, start=1):
        h, cout = _conv3x3_s2_relu_nhwc(h, w, b, cin_real)
        cin_real = cout                # next stage's real input channel count
        if stage == position:
            feat = h[..., :cout]
            break
    # Single NHWC -> NCHW transpose, only on the returned feature map.
    return jnp.transpose(feat, (0, 3, 1, 2))


class ModelFeaturesExtractor:
    """JAX/Pallas port of the PyTorch ModelFeaturesExtractor (ENCODER path)."""

    def __init__(self, params, in_channels=3,
                 feature_type: FeatureType = FeatureType.ENCODER, position=0):
        self.params = params
        self.feature_type = feature_type
        self.position = position
        if feature_type == FeatureType.ENCODER:
            out_channels = (in_channels,) + tuple(w.shape[0] for (w, _) in params)
            if not (0 <= position < len(out_channels)):
                raise ValueError(f"position {position} out of range")
            self.out_chans = out_channels[position]
            self._fwd = jax.jit(partial(encoder_features,
                                        params=params, position=position))
        elif feature_type == FeatureType.DECODER:
            # TODO(synk): DECODER path needs the wrapped SMP decoder plus a
            # forward hook on decoder.blocks[position]; no generic Pallas
            # equivalent for an arbitrary wrapped model.
            raise NotImplementedError("DECODER feature extraction not implemented")
        else:
            raise ValueError(f"Invalid type {feature_type}")

    def __call__(self, x_nchw):
        if self.feature_type == FeatureType.ENCODER:
            return self._fwd(x_nchw)
        raise ValueError(f"Invalid type {self.feature_type}")


# ---------------------------------------------------------------------------
# Pure-JAX reference (torch.nn.Conv2d semantics) for correctness checking.
# ---------------------------------------------------------------------------
def _reference_encoder_features(x_nchw, params, position):
    feats = [x_nchw]
    h = x_nchw
    for (w, b) in params:
        h = jax.lax.conv_general_dilated(
            h, w, window_strides=(2, 2), padding=((1, 1), (1, 1)),
            dimension_numbers=("NCHW", "OIHW", "NCHW"),
            precision=jax.lax.Precision.HIGHEST)
        h = jnp.maximum(h + b[None, :, None, None], 0.0)
        feats.append(h)
    return feats[position]


if __name__ == "__main__":
    key = jax.random.PRNGKey(0)
    k_x, k_p = jax.random.split(key)

    # Small NCHW input, consistent with the module's conv-encoder forward.
    x = jax.random.normal(k_x, (2, 3, 16, 16), jnp.float32)
    params = init_encoder_params(k_p, in_channels=3, stage_channels=(16, 32))

    for position in (1, 2):
        extractor = ModelFeaturesExtractor(params, in_channels=3,
                                           feature_type=FeatureType.ENCODER,
                                           position=position)
        feats = jax.block_until_ready(extractor(x))
        hw = 16 // (2 ** position)
        assert feats.shape == (2, extractor.out_chans, hw, hw), feats.shape
        assert jnp.all(jnp.isfinite(feats))
        ref = _reference_encoder_features(x, params, position)
        assert jnp.allclose(feats, ref, rtol=2e-2, atol=2e-2), \
            float(jnp.max(jnp.abs(feats - ref)))

    # Position 0: SMP encoders expose the raw input as the first feature.
    e0 = ModelFeaturesExtractor(params, in_channels=3, position=0)
    f0 = jax.block_until_ready(e0(x))
    assert f0.shape == x.shape and jnp.allclose(f0, x)

    print("KERNEL_OK")
</pallas_src>

<mosaic_0001>
module attributes {stable_mosaic.version = 11 : i64} {
  func.func @_conv3x3_s2_kernel(%arg0: i32, %arg1: memref<1x9x9x8xf32, #tpu.memory_space<vmem>>, %arg2: memref<1x9x9x8xf32, #tpu.memory_space<vmem>>, %arg3: memref<1x9x9x8xf32, #tpu.memory_space<vmem>>, %arg4: memref<1x9x9x8xf32, #tpu.memory_space<vmem>>, %arg5: memref<9x8x128xf32, #tpu.memory_space<vmem>>, %arg6: memref<1x128xf32, #tpu.memory_space<vmem>>, %arg7: memref<1x8x8x128xf32, #tpu.memory_space<vmem>>) attributes {dimension_semantics = [#tpu.dimension_semantics<parallel>], iteration_bounds = array<i64: 2>, scalar_prefetch = 0 : i64, scratch_operands = 0 : i64, tpu.core_type = #tpu.core_type<tc>, window_params = [{transform_indices = @transform_0, window_bounds = array<i64: 1, 9, 9, 8>}, {transform_indices = @transform_1, window_bounds = array<i64: 1, 9, 9, 8>}, {transform_indices = @transform_2, window_bounds = array<i64: 1, 9, 9, 8>}, {transform_indices = @transform_3, window_bounds = array<i64: 1, 9, 9, 8>}, {pipeline_mode = #tpu.pipeline_mode<synchronous>, transform_indices = @transform_4, window_bounds = array<i64: 9, 8, 128>}, {pipeline_mode = #tpu.pipeline_mode<synchronous>, transform_indices = @transform_5, window_bounds = array<i64: 1, 128>}, {transform_indices = @transform_6, window_bounds = array<i64: 1, 8, 8, 128>}]} {
    %c0_i32 = arith.constant 0 : i32
    %c8_i32 = arith.constant 8 : i32
    %0 = arith.addi %c0_i32, %c8_i32 : i32
    %c1_i32 = arith.constant 1 : i32
    scf.for %arg8 = %c0_i32 to %0 step %c1_i32  : i32 {
      %c1_i32_1 = arith.constant 1 : i32
      %1 = arith.muli %arg8, %c1_i32_1 : i32
      %c0_i32_2 = arith.constant 0 : i32
      %2 = arith.addi %c0_i32_2, %1 : i32
      %cst = arith.constant 0.000000e+00 : f32
      %3 = vector.broadcast %cst : f32 to vector<8x128xf32>
      %c0_i32_3 = arith.constant 0 : i32
      %4 = arith.addi %2, %c0_i32_3 : i32
      %c0 = arith.constant 0 : index
      %5 = arith.index_cast %4 : i32 to index
      %c0_4 = arith.constant 0 : index
      %c0_5 = arith.constant 0 : index
      %6 = vector.load %arg1[%c0, %5, %c0_4, %c0_5] : memref<1x9x9x8xf32, #tpu.memory_space<vmem>>, vector<1x1x8x8xf32>
      %7 = vector.shape_cast %6 : vector<1x1x8x8xf32> to vector<8x8xf32>
      %c0_6 = arith.constant 0 : index
      %c0_7 = arith.constant 0 : index
      %c0_8 = arith.constant 0 : index
      %8 = vector.load %arg5[%c0_6, %c0_7, %c0_8] : memref<9x8x128xf32, #tpu.memory_space<vmem>>, vector<1x8x128xf32>
      %9 = vector.shape_cast %8 : vector<1x8x128xf32> to vector<8x128xf32>
      %cst_9 = arith.constant dense<0.000000e+00> : vector<8x128xf32>
      %10 = tpu.matmul %7, %9, %cst_9 {dimension_numbers = #tpu.dot_dimension_numbers<[1], [0], [0], [1], [0, 0, 1, 1], [], []>} : vector<8x8xf32>, vector<8x128xf32>, vector<8x128xf32> -> vector<8x128xf32>
      %11 = arith.addf %3, %10 : vector<8x128xf32>
      %c0_i32_10 = arith.constant 0 : i32
      %12 = arith.addi %2, %c0_i32_10 : i32
      %c0_11 = arith.constant 0 : index
      %13 = arith.index_cast %12 : i32 to index
      %c0_12 = arith.constant 0 : index
      %c0_13 = arith.constant 0 : index
      %14 = vector.load %arg2[%c0_11, %13, %c0_12, %c0_13] : memref<1x9x9x8xf32, #tpu.memory_space<vmem>>, vector<1x1x8x8xf32>
      %15 = vector.shape_cast %14 : vector<1x1x8x8xf32> to vector<8x8xf32>
      %c1 = arith.constant 1 : index
      %c0_14 = arith.constant 0 : index
      %c0_15 = arith.constant 0 : index
      %16 = vector.load %arg5[%c1, %c0_14, %c0_15] : memref<9x8x128xf32, #tpu.memory_space<vmem>>, vector<1x8x128xf32>
      %17 = vector.shape_cast %16 : vector<1x8x128xf32> to vector<8x128xf32>
      %cst_16 = arith.constant dense<0.000000e+00> : vector<8x128xf32>
      %18 = tpu.matmul %15, %17, %cst_16 {dimension_numbers = #tpu.dot_dimension_numbers<[1], [0], [0], [1], [0, 0, 1, 1], [], []>} : vector<8x8xf32>, vector<8x128xf32>, vector<8x128xf32> -> vector<8x128xf32>
      %19 = arith.addf %11, %18 : vector<8x128xf32>
      %c0_i32_17 = arith.constant 0 : i32
      %20 = arith.addi %2, %c0_i32_17 : i32
      %c0_18 = arith.constant 0 : index
      %21 = arith.index_cast %20 : i32 to index
      %c1_19 = arith.constant 1 : index
      %c0_20 = arith.constant 0 : index
      %22 = vector.load %arg1[%c0_18, %21, %c1_19, %c0_20] : memref<1x9x9x8xf32, #tpu.memory_space<vmem>>, vector<1x1x8x8xf32>
      %23 = vector.shape_cast %22 : vector<1x1x8x8xf32> to vector<8x8xf32>
      %c2 = arith.constant 2 : index
      %c0_21 = arith.constant 0 : index
      %c0_22 = arith.constant 0 : index
      %24 = vector.load %arg5[%c2, %c0_21, %c0_22] : memref<9x8x128xf32, #tpu.memory_space<vmem>>, vector<1x8x128xf32>
      %25 = vector.shape_cast %24 : vector<1x8x128xf32> to vector<8x128xf32>
      %cst_23 = arith.constant dense<0.000000e+00> : vector<8x128xf32>
      %26 = tpu.matmul %23, %25, %cst_23 {dimension_numbers = #tpu.dot_dimension_numbers<[1], [0], [0], [1], [0, 0, 1, 1], [], []>} : vector<8x8xf32>, vector<8x128xf32>, vector<8x128xf32> -> vector<8x128xf32>
      %27 = arith.addf %19, %26 : vector<8x128xf32>
      %c0_i32_24 = arith.constant 0 : i32
      %28 = arith.addi %2, %c0_i32_24 : i32
      %c0_25 = arith.constant 0 : index
      %29 = arith.index_cast %28 : i32 to index
      %c0_26 = arith.constant 0 : index
      %c0_27 = arith.constant 0 : index
      %30 = vector.load %arg3[%c0_25, %29, %c0_26, %c0_27] : memref<1x9x9x8xf32, #tpu.memory_space<vmem>>, vector<1x1x8x8xf32>
      %31 = vector.shape_cast %30 : vector<1x1x8x8xf32> to vector<8x8xf32>
      %c3 = arith.constant 3 : index
      %c0_28 = arith.constant 0 : index
      %c0_29 = arith.constant 0 : index
      %32 = vector.load %arg5[%c3, %c0_28, %c0_29] : memref<9x8x128xf32, #tpu.memory_space<vmem>>, vector<1x8x128xf32>
      %33 = vector.shape_cast %32 : vector<1x8x128xf32> to vector<8x128xf32>
      %cst_30 = arith.constant dense<0.000000e+00> : vector<8x128xf32>
      %34 = tpu.matmul %31, %33, %cst_30 {dimension_numbers = #tpu.dot_dimension_numbers<[1], [0], [0], [1], [0, 0, 1, 1], [], []>} : vector<8x8xf32>, vector<8x128xf32>, vector<8x128xf32> -> vector<8x128xf32>
      %35 = arith.addf %27, %34 : vector<8x128xf32>
      %c0_i32_31 = arith.constant 0 : i32
      %36 = arith.addi %2, %c0_i32_31 : i32
      %c0_32 = arith.constant 0 : index
      %37 = arith.index_cast %36 : i32 to index
      %c0_33 = arith.constant 0 : index
      %c0_34 = arith.constant 0 : index
      %38 = vector.load %arg4[%c0_32, %37, %c0_33, %c0_34] : memref<1x9x9x8xf32, #tpu.memory_space<vmem>>, vector<1x1x8x8xf32>
      %39 = vector.shape_cast %38 : vector<1x1x8x8xf32> to vector<8x8xf32>
      %c4 = arith.constant 4 : index
      %c0_35 = arith.constant 0 : index
      %c0_36 = arith.constant 0 : index
      %40 = vector.load %arg5[%c4, %c0_35, %c0_36] : memref<9x8x128xf32, #tpu.memory_space<vmem>>, vector<1x8x128xf32>
      %41 = vector.shape_cast %40 : vector<1x8x128xf32> to vector<8x128xf32>
      %cst_37 = arith.constant dense<0.000000e+00> : vector<8x128xf32>
      %42 = tpu.matmul %39, %41, %cst_37 {dimension_numbers = #tpu.dot_dimension_numbers<[1], [0], [0], [1], [0, 0, 1, 1], [], []>} : vector<8x8xf32>, vector<8x128xf32>, vector<8x128xf32> -> vector<8x128xf32>
      %43 = arith.addf %35, %42 : vector<8x128xf32>
      %c0_i32_38 = arith.constant 0 : i32
      %44 = arith.addi %2, %c0_i32_38 : i32
      %c0_39 = arith.constant 0 : index
      %45 = arith.index_cast %44 : i32 to index
      %c1_40 = arith.constant 1 : index
      %c0_41 = arith.constant 0 : index
      %46 = vector.load %arg3[%c0_39, %45, %c1_40, %c0_41] : memref<1x9x9x8xf32, #tpu.memory_space<vmem>>, vector<1x1x8x8xf32>
      %47 = vector.shape_cast %46 : vector<1x1x8x8xf32> to vector<8x8xf32>
      %c5 = arith.constant 5 : index
      %c0_42 = arith.constant 0 : index
      %c0_43 = arith.constant 0 : index
      %48 = vector.load %arg5[%c5, %c0_42, %c0_43] : memref<9x8x128xf32, #tpu.memory_space<vmem>>, vector<1x8x128xf32>
      %49 = vector.shape_cast %48 : vector<1x8x128xf32> to vector<8x128xf32>
      %cst_44 = arith.constant dense<0.000000e+00> : vector<8x128xf32>
      %50 = tpu.matmul %47, %49, %cst_44 {dimension_numbers = #tpu.dot_dimension_numbers<[1], [0], [0], [1], [0, 0, 1, 1], [], []>} : vector<8x8xf32>, vector<8x128xf32>, vector<8x128xf32> -> vector<8x128xf32>
      %51 = arith.addf %43, %50 : vector<8x128xf32>
      %c1_i32_45 = arith.constant 1 : i32
      %52 = arith.addi %2, %c1_i32_45 : i32
      %c0_46 = arith.constant 0 : index
      %53 = arith.index_cast %52 : i32 to index
      %c0_47 = arith.constant 0 : index
      %c0_48 = arith.constant 0 : index
      %54 = vector.load %arg1[%c0_46, %53, %c0_47, %c0_48] : memref<1x9x9x8xf32, #tpu.memory_space<vmem>>, vector<1x1x8x8xf32>
      %55 = vector.shape_cast %54 : vector<1x1x8x8xf32> to vector<8x8xf32>
      %c6 = arith.constant 6 : index
      %c0_49 = arith.constant 0 : index
      %c0_50 = arith.constant 0 : index
      %56 = vector.load %arg5[%c6, %c0_49, %c0_50] : memref<9x8x128xf32, #tpu.memory_space<vmem>>, vector<1x8x128xf32>
      %57 = vector.shape_cast %56 : vector<1x8x128xf32> to vector<8x128xf32>
      %cst_51 = arith.constant dense<0.000000e+00> : vector<8x128xf32>
      %58 = tpu.matmul %55, %57, %cst_51 {dimension_numbers = #tpu.dot_dimension_numbers<[1], [0], [0], [1], [0, 0, 1, 1], [], []>} : vector<8x8xf32>, vector<8x128xf32>, vector<8x128xf32> -> vector<8x128xf32>
      %59 = arith.addf %51, %58 : vector<8x128xf32>
      %c1_i32_52 = arith.constant 1 : i32
      %60 = arith.addi %2, %c1_i32_52 : i32
      %c0_53 = arith.constant 0 : index
      %61 = arith.index_cast %60 : i32 to index
      %c0_54 = arith.constant 0 : index
      %c0_55 = arith.constant 0 : index
      %62 = vector.load %arg2[%c0_53, %61, %c0_54, %c0_55] : memref<1x9x9x8xf32, #tpu.memory_space<vmem>>, vector<1x1x8x8xf32>
      %63 = vector.shape_cast %62 : vector<1x1x8x8xf32> to vector<8x8xf32>
      %c7 = arith.constant 7 : index
      %c0_56 = arith.constant 0 : index
      %c0_57 = arith.constant 0 : index
      %64 = vector.load %arg5[%c7, %c0_56, %c0_57] : memref<9x8x128xf32, #tpu.memory_space<vmem>>, vector<1x8x128xf32>
      %65 = vector.shape_cast %64 : vector<1x8x128xf32> to vector<8x128xf32>
      %cst_58 = arith.constant dense<0.000000e+00> : vector<8x128xf32>
      %66 = tpu.matmul %63, %65, %cst_58 {dimension_numbers = #tpu.dot_dimension_numbers<[1], [0], [0], [1], [0, 0, 1, 1], [], []>} : vector<8x8xf32>, vector<8x128xf32>, vector<8x128xf32> -> vector<8x128xf32>
      %67 = arith.addf %59, %66 : vector<8x128xf32>
      %c1_i32_59 = arith.constant 1 : i32
      %68 = arith.addi %2, %c1_i32_59 : i32
      %c0_60 = arith.constant 0 : index
      %69 = arith.index_cast %68 : i32 to index
      %c1_61 = arith.constant 1 : index
      %c0_62 = arith.constant 0 : index
      %70 = vector.load %arg1[%c0_60, %69, %c1_61, %c0_62] : memref<1x9x9x8xf32, #tpu.memory_space<vmem>>, vector<1x1x8x8xf32>
      %71 = vector.shape_cast %70 : vector<1x1x8x8xf32> to vector<8x8xf32>
      %c8 = arith.constant 8 : index
      %c0_63 = arith.constant 0 : index
      %c0_64 = arith.constant 0 : index
      %72 = vector.load %arg5[%c8, %c0_63, %c0_64] : memref<9x8x128xf32, #tpu.memory_space<vmem>>, vector<1x8x128xf32>
      %73 = vector.shape_cast %72 : vector<1x8x128xf32> to vector<8x128xf32>
      %cst_65 = arith.constant dense<0.000000e+00> : vector<8x128xf32>
      %74 = tpu.matmul %71, %73, %cst_65 {dimension_numbers = #tpu.dot_dimension_numbers<[1], [0], [0], [1], [0, 0, 1, 1], [], []>} : vector<8x8xf32>, vector<8x128xf32>, vector<8x128xf32> -> vector<8x128xf32>
      %75 = arith.addf %67, %74 : vector<8x128xf32>
      %c0_66 = arith.constant 0 : index
      %c0_67 = arith.constant 0 : index
      %76 = vector.load %arg6[%c0_66, %c0_67] : memref<1x128xf32, #tpu.memory_space<vmem>>, vector<1x128xf32>
      %77 = vector.broadcast %76 : vector<1x128xf32> to vector<8x128xf32>
      %78 = arith.addf %75, %77 : vector<8x128xf32>
      %cst_68 = arith.constant 0.000000e+00 : f32
      %79 = vector.broadcast %cst_68 : f32 to vector<8x128xf32>
      %80 = arith.maximumf %78, %79 : vector<8x128xf32>
      %c0_69 = arith.constant 0 : index
      %81 = arith.index_cast %2 : i32 to index
      %c0_70 = arith.constant 0 : index
      %c0_71 = arith.constant 0 : index
      %82 = vector.load %arg7[%c0_69, %81, %c0_70, %c0_71] : memref<1x8x8x128xf32, #tpu.memory_space<vmem>>, vector<1x1x8x128xf32>
      %83 = vector.shape_cast %82 : vector<1x1x8x128xf32> to vector<8x128xf32>
      %84 = vector.shape_cast %80 : vector<8x128xf32> to vector<1x1x8x128xf32>
      tpu.vector_store %arg7[%c0_69, %81, %c0_70, %c0_71], %84 {strides = array<i32>} : memref<1x8x8x128xf32, #tpu.memory_space<vmem>>, vector<1x1x8x128xf32>,
    }
    %c8_i32_0 = arith.constant 8 : i32
    return
  }
  func.func @transform_0(%arg0: i32) -> (i32, i32, i32, i32) {
    %c0_i32 = arith.constant 0 : i32
    %c0_i32_0 = arith.constant 0 : i32
    %c0_i32_1 = arith.constant 0 : i32
    %c0_i32_2 = arith.constant 0 : i32
    return %arg0, %c0_i32, %c0_i32_0, %c0_i32_1 : i32, i32, i32, i32
  }
  func.func @transform_1(%arg0: i32) -> (i32, i32, i32, i32) {
    %c0_i32 = arith.constant 0 : i32
    %c0_i32_0 = arith.constant 0 : i32
    %c0_i32_1 = arith.constant 0 : i32
    %c0_i32_2 = arith.constant 0 : i32
    return %arg0, %c0_i32, %c0_i32_0, %c0_i32_1 : i32, i32, i32, i32
  }
  func.func @transform_2(%arg0: i32) -> (i32, i32, i32, i32) {
    %c0_i32 = arith.constant 0 : i32
    %c0_i32_0 = arith.constant 0 : i32
    %c0_i32_1 = arith.constant 0 : i32
    %c0_i32_2 = arith.constant 0 : i32
    return %arg0, %c0_i32, %c0_i32_0, %c0_i32_1 : i32, i32, i32, i32
  }
  func.func @transform_3(%arg0: i32) -> (i32, i32, i32, i32) {
    %c0_i32 = arith.constant 0 : i32
    %c0_i32_0 = arith.constant 0 : i32
    %c0_i32_1 = arith.constant 0 : i32
    %c0_i32_2 = arith.constant 0 : i32
    return %arg0, %c0_i32, %c0_i32_0, %c0_i32_1 : i32, i32, i32, i32
  }
  func.func @transform_4(%arg0: i32) -> (i32, i32, i32) {
    %c0_i32 = arith.constant 0 : i32
    %c0_i32_0 = arith.constant 0 : i32
    %c0_i32_1 = arith.constant 0 : i32
    %c0_i32_2 = arith.constant 0 : i32
    return %c0_i32, %c0_i32_0, %c0_i32_1 : i32, i32, i32
  }
  func.func @transform_5(%arg0: i32) -> (i32, i32) {
    %c0_i32 = arith.constant 0 : i32
    %c0_i32_0 = arith.constant 0 : i32
    %c0_i32_1 = arith.constant 0 : i32
    return %c0_i32, %c0_i32_0 : i32, i32
  }
  func.func @transform_6(%arg0: i32) -> (i32, i32, i32, i32) {
    %c0_i32 = arith.constant 0 : i32
    %c0_i32_0 = arith.constant 0 : i32
    %c0_i32_1 = arith.constant 0 : i32
    %c0_i32_2 = arith.constant 0 : i32
    return %arg0, %c0_i32, %c0_i32_0, %c0_i32_1 : i32, i32, i32, i32
  }
}

</mosaic_0001>

<llo_original>
// kernel: encoder_features.1
$region0: #{encoder_features.1}
  #allocation0 [shape = 'u32[]', space=smem, size = 0x4, offset = 0x4, fixed_abs, tag = 'smem constant byte address 0x4 - core index']
  #allocation1 [shape = 'u32[72,128]{1,0:T(1,128)}', space=vmem, size = 0x9000, scoped, tag = 'internal scratch']
  %s0 = inlined_call_operand.vmem [shape: f32[2,9,9,8], index: 0, kind: input, shape index: {}]
  %s1 = inlined_call_operand.vmem [shape: f32[2,9,9,8], index: 1, kind: input, shape index: {}]
  %s2 = inlined_call_operand.vmem [shape: f32[2,9,9,8], index: 2, kind: input, shape index: {}]
  %s3 = inlined_call_operand.vmem [shape: f32[2,9,9,8], index: 3, kind: input, shape index: {}]
  %s4 = inlined_call_operand.vmem [shape: f32[9,8,128], index: 4, kind: input, shape index: {}]
  %s5 = inlined_call_operand.vmem [shape: f32[1,128], index: 5, kind: input, shape index: {}]
  %s6 = inlined_call_operand.vmem [shape: f32[2,8,8,128], index: 6, kind: output, shape index: {}]
  %s7 = sld [smem:[#allocation0]]
  $region64: #{encoder_features.1} parent=0
    _
  %s9 = ssub.s32 1, %s7
  %s10 = scalar_select 0, %s9, %s7
  loop: start=0, step=1, limit=4
  $region2: #{encoder_features.1} parent=0 // loop_pre_header
    _
  $region3: #{encoder_features.1} parent=0 // loop_header
    %s12 = sphi 0, %s16
    %p13 = scmp.ge.s32.totalorder %s12, 4
    %s22 = sphi 0, %s24
    %s25 = sphi 0, %s22
    %s26 = sphi 0, %s25
    %s42 = sphi 0, %s26
    %s48 = sphi 0, %s50
    %s51 = sphi 0, %s48
    %s52 = sphi 0, %s51
    %s68 = sphi 0, %s52
    %s74 = sphi 0, %s76
    %s77 = sphi 0, %s74
    %s78 = sphi 0, %s77
    %s94 = sphi 0, %s78
    %s100 = sphi 0, %s102
    %s103 = sphi 0, %s100
    %s104 = sphi 0, %s103
    %s120 = sphi 0, %s104
    %s124 = sphi 0, %s124
    %s126 = sphi 0, %s124
    %s127 = sphi 0, %s126
    %s141 = sphi 0, %s127
    %s145 = sphi 0, %s145
    %s147 = sphi 0, %s145
    %s148 = sphi 0, %s147
    %s162 = sphi 0, %s148
    %s168 = sphi 0, %s170
    %s171 = sphi 0, %s168
    %s172 = sphi 0, %s171
    %s188 = sphi 0, %s172
  $region4: #{encoder_features.1} parent=0 // loop_header_branch
    %15 = sbr.rel (%p13) target = $region8
  $region5: #{encoder_features.1} parent=0 // loop_body
    %s17 = ssub.s32 %s12, 1
    %s18 = ssub.s32 %s12, 2
    %s19 = sadd.s32 %s12, 1
    %s20 = ssub.s32 %s12, %s19
    %p21 = scmp.eq.s32.totalorder %s20, 0
    %s23 = sadd.s32 %s22, 1
    %s24 = scalar_select %p21, %s22, %s23
    %p27 = pneg %p21
    %p28 = scmp.eq.s32.totalorder %s12, 1
    %p29 = por %p27, %p28
    %p30 = scmp.ne.s32.totalorder %s22, %s25
    %p31 = scmp.eq.s32.totalorder %s12, 0
    %p32 = por %p30, %p31
    %p33 = scmp.ne.s32.totalorder %s22, %s25
    %p34 = scmp.eq.s32.totalorder %s17, 1
    %p35 = por %p33, %p34
    %p36 = scmp.ne.s32.totalorder %s25, %s26
    %p37 = scmp.eq.s32.totalorder %s17, 0
    %p38 = por %p36, %p37
    %p39 = scmp.ne.s32.totalorder %s25, %s26
    %p40 = scmp.eq.s32.totalorder %s18, 1
    %p41 = por %p39, %p40
    %p43 = scmp.ne.s32.totalorder %s26, %s42
    %p44 = scmp.eq.s32.totalorder %s18, 0
    %p45 = por %p43, %p44
    %s46 = ssub.s32 %s12, %s19
    %p47 = scmp.eq.s32.totalorder %s46, 0
    %s49 = sadd.s32 %s48, 1
    %s50 = scalar_select %p47, %s48, %s49
    %p53 = pneg %p47
    %p54 = scmp.eq.s32.totalorder %s12, 1
    %p55 = por %p53, %p54
    %p56 = scmp.ne.s32.totalorder %s48, %s51
    %p57 = scmp.eq.s32.totalorder %s12, 0
    %p58 = por %p56, %p57
    %p59 = scmp.ne.s32.totalorder %s48, %s51
    %p60 = scmp.eq.s32.totalorder %s17, 1
    %p61 = por %p59, %p60
    %p62 = scmp.ne.s32.totalorder %s51, %s52
    %p63 = scmp.eq.s32.totalorder %s17, 0
    %p64 = por %p62, %p63
    %p65 = scmp.ne.s32.totalorder %s51, %s52
    %p66 = scmp.eq.s32.totalorder %s18, 1
    %p67 = por %p65, %p66
    %p69 = scmp.ne.s32.totalorder %s52, %s68
    %p70 = scmp.eq.s32.totalorder %s18, 0
    %p71 = por %p69, %p70
    %s72 = ssub.s32 %s12, %s19
    %p73 = scmp.eq.s32.totalorder %s72, 0
    %s75 = sadd.s32 %s74, 1
    %s76 = scalar_select %p73, %s74, %s75
    %p79 = pneg %p73
    %p80 = scmp.eq.s32.totalorder %s12, 1
    %p81 = por %p79, %p80
    %p82 = scmp.ne.s32.totalorder %s74, %s77
    %p83 = scmp.eq.s32.totalorder %s12, 0
    %p84 = por %p82, %p83
    %p85 = scmp.ne.s32.totalorder %s74, %s77
    %p86 = scmp.eq.s32.totalorder %s17, 1
    %p87 = por %p85, %p86
    %p88 = scmp.ne.s32.totalorder %s77, %s78
    %p89 = scmp.eq.s32.totalorder %s17, 0
    %p90 = por %p88, %p89
    %p91 = scmp.ne.s32.totalorder %s77, %s78
    %p92 = scmp.eq.s32.totalorder %s18, 1
    %p93 = por %p91, %p92
    %p95 = scmp.ne.s32.totalorder %s78, %s94
    %p96 = scmp.eq.s32.totalorder %s18, 0
    %p97 = por %p95, %p96
    %s98 = ssub.s32 %s12, %s19
    %p99 = scmp.eq.s32.totalorder %s98, 0
    %s101 = sadd.s32 %s100, 1
    %s102 = scalar_select %p99, %s100, %s101
    %p105 = pneg %p99
    %p106 = scmp.eq.s32.totalorder %s12, 1
    %p107 = por %p105, %p106
    %p108 = scmp.ne.s32.totalorder %s100, %s103
    %p109 = scmp.eq.s32.totalorder %s12, 0
    %p110 = por %p108, %p109
    %p111 = scmp.ne.s32.totalorder %s100, %s103
    %p112 = scmp.eq.s32.totalorder %s17, 1
    %p113 = por %p111, %p112
    %p114 = scmp.ne.s32.totalorder %s103, %s104
    %p115 = scmp.eq.s32.totalorder %s17, 0
    %p116 = por %p114, %p115
    %p117 = scmp.ne.s32.totalorder %s103, %s104
    %p118 = scmp.eq.s32.totalorder %s18, 1
    %p119 = por %p117, %p118
    %p121 = scmp.ne.s32.totalorder %s104, %s120
    %p122 = scmp.eq.s32.totalorder %s18, 0
    %p123 = por %p121, %p122
    %s125 = sadd.s32 %s124, 1
    %p128 = scmp.eq.s32.totalorder %s12, 1
    %p129 = scmp.ne.s32.totalorder %s124, %s126
    %p130 = scmp.eq.s32.totalorder %s12, 0
    %p131 = por %p129, %p130
    %p132 = scmp.ne.s32.totalorder %s124, %s126
    %p133 = scmp.eq.s32.totalorder %s17, 1
    %p134 = por %p132, %p133
    %p135 = scmp.ne.s32.totalorder %s126, %s127
    %p136 = scmp.eq.s32.totalorder %s17, 0
    %p137 = por %p135, %p136
    %p138 = scmp.ne.s32.totalorder %s126, %s127
    %p139 = scmp.eq.s32.totalorder %s18, 1
    %p140 = por %p138, %p139
    %p142 = scmp.ne.s32.totalorder %s127, %s141
    %p143 = scmp.eq.s32.totalorder %s18, 0
    %p144 = por %p142, %p143
    %s146 = sadd.s32 %s145, 1
    %p149 = scmp.eq.s32.totalorder %s12, 1
    %p150 = scmp.ne.s32.totalorder %s145, %s147
    %p151 = scmp.eq.s32.totalorder %s12, 0
    %p152 = por %p150, %p151
    %p153 = scmp.ne.s32.totalorder %s145, %s147
    %p154 = scmp.eq.s32.totalorder %s17, 1
    %p155 = por %p153, %p154
    %p156 = scmp.ne.s32.totalorder %s147, %s148
    %p157 = scmp.eq.s32.totalorder %s17, 0
    %p158 = por %p156, %p157
    %p159 = scmp.ne.s32.totalorder %s147, %s148
    %p160 = scmp.eq.s32.totalorder %s18, 1
    %p161 = por %p159, %p160
    %p163 = scmp.ne.s32.totalorder %s148, %s162
    %p164 = scmp.eq.s32.totalorder %s18, 0
    %p165 = por %p163, %p164
    %s166 = ssub.s32 %s12, %s19
    %p167 = scmp.eq.s32.totalorder %s166, 0
    %s169 = sadd.s32 %s168, 1
    %s170 = scalar_select %p167, %s168, %s169
    %p173 = pneg %p167
    %p174 = scmp.eq.s32.totalorder %s12, 1
    %p175 = por %p173, %p174
    %p176 = scmp.ne.s32.totalorder %s168, %s171
    %p177 = scmp.eq.s32.totalorder %s12, 0
    %p178 = por %p176, %p177
    %p179 = scmp.ne.s32.totalorder %s168, %s171
    %p180 = scmp.eq.s32.totalorder %s17, 1
    %p181 = por %p179, %p180
    %p182 = scmp.ne.s32.totalorder %s171, %s172
    %p183 = scmp.eq.s32.totalorder %s17, 0
    %p184 = por %p182, %p183
    %p185 = scmp.ne.s32.totalorder %s171, %s172
    %p186 = scmp.eq.s32.totalorder %s18, 1
    %p187 = por %p185, %p186
    %p189 = scmp.ne.s32.totalorder %s172, %s188
    %p190 = scmp.eq.s32.totalorder %s18, 0
    %p191 = por %p189, %p190
    %p192 = scmp.le.s32.totalorder 1, %s12
    %p193 = scmp.lt.s32.totalorder %s12, 3
    %p194 = pnand %p192, %p193
    %p195 = pneg %p194
    // Predicated region
    $region9: #{encoder_features.1} parent=5 // pred_check
      _
    $region10: #{encoder_features.1} parent=5 // pred_check_branch
      %197 = sbr.rel (%p194) target = $region12
    $region11: #{encoder_features.1} parent=5 // pred_region
      %s198 = ssub.s32 %s12, 1
      // Predicated region
      $region13: #{encoder_features.1} parent=11 // pred_check
        %p199 = pneg %p137
      $region14: #{encoder_features.1} parent=11 // pred_check_branch
        %201 = sbr.rel (%p199) target = $region16
      $region15: #{encoder_features.1} parent=11 // pred_region
        _
      $region16: #{encoder_features.1} parent=11 // pred_fallthru
        _
      // Predicated region
      $region17: #{encoder_features.1} parent=11 // pred_check
        %p202 = pneg %p158
      $region18: #{encoder_features.1} parent=11 // pred_check_branch
        %204 = sbr.rel (%p202) target = $region20
      $region19: #{encoder_features.1} parent=11 // pred_region
        _
      $region20: #{encoder_features.1} parent=11 // pred_fallthru
        _
    $region12: #{encoder_features.1} parent=5 // pred_fallthru
      _
    %p205 = scmp.lt.s32.totalorder %s12, 2
    // Predicated region
    $region21: #{encoder_features.1} parent=5 // pred_check
      %p206 = pneg %p205
    $region22: #{encoder_features.1} parent=5 // pred_check_branch
      %208 = sbr.rel (%p206) target = $region24
    $region23: #{encoder_features.1} parent=5 // pred_region
      // Predicated region
      $region25: #{encoder_features.1} parent=23 // pred_check
        %p209 = pneg %p32
      $region26: #{encoder_features.1} parent=23 // pred_check_branch
        %211 = sbr.rel (%p209) target = $region28
      $region27: #{encoder_features.1} parent=23 // pred_region
        %p212 = scmp.lt.s32.totalorder %s12, 1
        %s213 = scalar_select %p212, %s12, 1
        %s214 = smul.addr %s213, 18
        %s215 = smul.addr %s214, 8
        %s216 = scalar_lea.vmem %s0, %s215
      $region28: #{encoder_features.1} parent=23 // pred_fallthru
        _
      // Predicated region
      $region29: #{encoder_features.1} parent=23 // pred_check
        %p217 = pneg %p58
      $region30: #{encoder_features.1} parent=23 // pred_check_branch
        %219 = sbr.rel (%p217) target = $region32
      $region31: #{encoder_features.1} parent=23 // pred_region
        %p220 = scmp.lt.s32.totalorder %s12, 1
        %s221 = scalar_select %p220, %s12, 1
        %s222 = smul.addr %s221, 18
        %s223 = smul.addr %s222, 8
        %s224 = scalar_lea.vmem %s1, %s223
      $region32: #{encoder_features.1} parent=23 // pred_fallthru
        _
      // Predicated region
      $region33: #{encoder_features.1} parent=23 // pred_check
        %p225 = pneg %p84
      $region34: #{encoder_features.1} parent=23 // pred_check_branch
        %227 = sbr.rel (%p225) target = $region36
      $region35: #{encoder_features.1} parent=23 // pred_region
        %p228 = scmp.lt.s32.totalorder %s12, 1
        %s229 = scalar_select %p228, %s12, 1
        %s230 = smul.addr %s229, 18
        %s231 = smul.addr %s230, 8
        %s232 = scalar_lea.vmem %s2, %s231
      $region36: #{encoder_features.1} parent=23 // pred_fallthru
        _
      // Predicated region
      $region37: #{encoder_features.1} parent=23 // pred_check
        %p233 = pneg %p110
      $region38: #{encoder_features.1} parent=23 // pred_check_branch
        %235 = sbr.rel (%p233) target = $region40
      $region39: #{encoder_features.1} parent=23 // pred_region
        %p236 = scmp.lt.s32.totalorder %s12, 1
        %s237 = scalar_select %p236, %s12, 1
        %s238 = smul.addr %s237, 18
        %s239 = smul.addr %s238, 8
        %s240 = scalar_lea.vmem %s3, %s239
      $region40: #{encoder_features.1} parent=23 // pred_fallthru
        _
    $region24: #{encoder_features.1} parent=5 // pred_fallthru
      _
    %p241 = scmp.le.s32.totalorder 1, %s12
    %p242 = scmp.lt.s32.totalorder %s12, 3
    %p243 = pnand %p241, %p242
    %p244 = pneg %p243
    // Predicated region
    $region41: #{encoder_features.1} parent=5 // pred_check
      _
    $region42: #{encoder_features.1} parent=5 // pred_check_branch
      %246 = sbr.rel (%p243) target = $region44
    $region43: #{encoder_features.1} parent=5 // pred_region
      %s247 = ssub.s32 %s12, 1
      %p248 = scmp.lt.s32.totalorder %s17, 1
      %s249 = scalar_select %p248, %s17, 1
      %s250 = smul.addr %s249, 18
      %s251 = smul.addr %s250, 8
      %s252 = scalar_lea.vmem %s0, %s251
      %p253 = pneg %p38
      %p254 = pneg %p35
      %p255 = scmp.lt.s32.totalorder %s17, 1
      %s256 = scalar_select %p255, %s17, 1
      %s257 = smul.addr %s256, 18
      %s258 = smul.addr %s257, 8
      %s259 = scalar_lea.vmem %s1, %s258
      %p260 = pneg %p64
      %p261 = pneg %p61
      %p262 = scmp.lt.s32.totalorder %s17, 1
      %s263 = scalar_select %p262, %s17, 1
      %s264 = smul.addr %s263, 18
      %s265 = smul.addr %s264, 8
      %s266 = scalar_lea.vmem %s2, %s265
      %p267 = pneg %p90
      %p268 = pneg %p87
      %p269 = scmp.lt.s32.totalorder %s17, 1
      %s270 = scalar_select %p269, %s17, 1
      %s271 = smul.addr %s270, 18
      %s272 = smul.addr %s271, 8
      %s273 = scalar_lea.vmem %s3, %s272
      %p274 = pneg %p116
      %p275 = pneg %p113
      %p276 = pneg %p137
      %p277 = pneg %p134
      %p278 = pneg %p158
      %p279 = pneg %p155
      %p280 = pneg %p184
      %p281 = pneg %p181
      %p282 = scmp.lt.s32.totalorder %s17, 1
      %s283 = scalar_select %p282, %s17, 1
      %s284 = smul.addr %s283, 8
      %s285 = smul.addr %s284, 8
      %s286 = scalar_lea.vmem %s6, %s285
      %p287 = scmp.lt.s32.totalorder %s17, 1
      %s288 = scalar_select %p287, %s17, 1
      %s289 = smul.addr %s288, 18
      %s290 = smul.addr %s289, 8
      %s291 = scalar_lea.vmem %s0, %s290
      %p292 = scmp.lt.s32.totalorder %s17, 1
      %s293 = scalar_select %p292, %s17, 1
      %s294 = smul.addr %s293, 18
      %s295 = smul.addr %s294, 8
      %s296 = scalar_lea.vmem %s1, %s295
      %p297 = scmp.lt.s32.totalorder %s17, 1
      %s298 = scalar_select %p297, %s17, 1
      %s299 = smul.addr %s298, 18
      %s300 = smul.addr %s299, 8
      %s301 = scalar_lea.vmem %s2, %s300
      %p302 = scmp.lt.s32.totalorder %s17, 1
      %s303 = scalar_select %p302, %s17, 1
      %s304 = smul.addr %s303, 18
      %s305 = smul.addr %s304, 8
      %s306 = scalar_lea.vmem %s3, %s305
      %p307 = scmp.lt.s32.totalorder %s17, 1
      %s308 = scalar_select %p307, %s17, 1
      %s309 = smul.addr %s308, 8
      %s310 = smul.addr %s309, 8
      %s311 = scalar_lea.vmem %s6, %s310
      loop: start=0, step=1, limit=8
      $region45: #{encoder_features.1} parent=43 // loop_pre_header
        _
      $region46: #{encoder_features.1} parent=43 // loop_header
        %s313 = sphi 0, %s317
        %p314 = scmp.ge.s32.totalorder %s313, 8
      $region47: #{encoder_features.1} parent=43 // loop_header_branch
        %316 = sbr.rel (%p314) target = $region51
      $region48: #{encoder_features.1} parent=43 // loop_body
        %s318 = smul.u32 %s313, 16
        %s319 = scalar_lea.vmem %s291, %s318
        %v320 = vld [vmem:[%s319] sm:$0xff]
        %v321 = vld [vmem:[%s4] sm:$0xff]
        %s322 = scalar_lea.vmem %s296, %s318
        %v323 = vld [vmem:[%s322] sm:$0xff]
        %s324 = scalar_lea.vmem %s4, 8
        %v325 = vld [vmem:[%s324] sm:$0xff]
        %vm326 = vcmask 64512
        %v328 = vsel %vm326, %v323, 0
        %330 = vmatpush.msra.mxu0 0.0
        %331 = vmatpush.msra.mxu0 0.0
        %332 = vmatpush.msra.mxu0 0.0
        %333 = vmatpush.msra.mxu0 0.0
        %334 = vmatpush.msra.mxu0 0.0
        %335 = vmatpush.msra.mxu0 0.0
        %336 = vmatpush.msra.mxu0 0.0
        %337 = vmatpush.msra.mxu0 0.0
        %338 = vmatpush.msra.mxu0 0.0
        %339 = vmatpush.msra.mxu0 0.0
        %340 = vmatpush.msra.mxu0 0.0
        %341 = vmatpush.msra.mxu0 0.0
        %342 = vmatpush.msra.mxu0 0.0
        %343 = vmatpush.msra.mxu0 0.0
        %344 = vmatpush.msra.mxu0 0.0
        %345 = vmatpush.msra.mxu0 %v325
        %346 = vmatmul.f32.gmra.mxu0 %v328
        %v347 = vpop.f32.mrf.mxu0
        %v348 = vadd.f32 0.0, %v347
        %349 = vdwg.mxu0
        %v351 = vsel %vm326, %v320, 0
        %353 = vmatpush.msra.mxu0 0.0
        %354 = vmatpush.msra.mxu0 0.0
        %355 = vmatpush.msra.mxu0 0.0
        %356 = vmatpush.msra.mxu0 0.0
        %357 = vmatpush.msra.mxu0 0.0
        %358 = vmatpush.msra.mxu0 0.0
        %359 = vmatpush.msra.mxu0 0.0
        %360 = vmatpush.msra.mxu0 0.0
        %361 = vmatpush.msra.mxu0 0.0
        %362 = vmatpush.msra.mxu0 0.0
        %363 = vmatpush.msra.mxu0 0.0
        %364 = vmatpush.msra.mxu0 0.0
        %365 = vmatpush.msra.mxu0 0.0
        %366 = vmatpush.msra.mxu0 0.0
        %367 = vmatpush.msra.mxu0 0.0
        %368 = vmatpush.msra.mxu0 %v321
        %369 = vmatmul.f32.gmra.mxu0 %v351
        %v370 = vpop.f32.mrf.mxu0
        %v371 = vadd.f32 %v348, %v370
        %372 = vdwg.mxu0
        %v373 = vld [vmem:[%s319 + $0x1] sm:$0xff]
        %s374 = scalar_lea.vmem %s4, 16
        %v375 = vld [vmem:[%s374] sm:$0xff]
        %v377 = vsel %vm326, %v373, 0
        %379 = vmatpush.msra.mxu0 0.0
        %380 = vmatpush.msra.mxu0 0.0
        %381 = vmatpush.msra.mxu0 0.0
        %382 = vmatpush.msra.mxu0 0.0
        %383 = vmatpush.msra.mxu0 0.0
        %384 = vmatpush.msra.mxu0 0.0
        %385 = vmatpush.msra.mxu0 0.0
        %386 = vmatpush.msra.mxu0 0.0
        %387 = vmatpush.msra.mxu0 0.0
        %388 = vmatpush.msra.mxu0 0.0
        %389 = vmatpush.msra.mxu0 0.0
        %390 = vmatpush.msra.mxu0 0.0
        %391 = vmatpush.msra.mxu0 0.0
        %392 = vmatpush.msra.mxu0 0.0
        %393 = vmatpush.msra.mxu0 0.0
        %394 = vmatpush.msra.mxu0 %v375
        %395 = vmatmul.f32.gmra.mxu0 %v377
        %v396 = vpop.f32.mrf.mxu0
        %v397 = vadd.f32 0.0, %v396
        %398 = vdwg.mxu0
        %v399 = vadd.f32 %v371, %v397
        %s400 = scalar_lea.vmem %s301, %s318
        %v401 = vld [vmem:[%s400] sm:$0xff]
        %s402 = scalar_lea.vmem %s4, 24
        %v403 = vld [vmem:[%s402] sm:$0xff]
        %v405 = vsel %vm326, %v401, 0
        %407 = vmatpush.msra.mxu0 0.0
        %408 = vmatpush.msra.mxu0 0.0
        %409 = vmatpush.msra.mxu0 0.0
        %410 = vmatpush.msra.mxu0 0.0
        %411 = vmatpush.msra.mxu0 0.0
        %412 = vmatpush.msra.mxu0 0.0
        %413 = vmatpush.msra.mxu0 0.0
        %414 = vmatpush.msra.mxu0 0.0
        %415 = vmatpush.msra.mxu0 0.0
        %416 = vmatpush.msra.mxu0 0.0
        %417 = vmatpush.msra.mxu0 0.0
        %418 = vmatpush.msra.mxu0 0.0
        %419 = vmatpush.msra.mxu0 0.0
        %420 = vmatpush.msra.mxu0 0.0
        %421 = vmatpush.msra.mxu0 0.0
        %422 = vmatpush.msra.mxu0 %v403
        %423 = vmatmul.f32.gmra.mxu0 %v405
        %v424 = vpop.f32.mrf.mxu0
        %v425 = vadd.f32 0.0, %v424
        %426 = vdwg.mxu0
        %v427 = vadd.f32 %v399, %v425
        %s428 = scalar_lea.vmem %s306, %s318
        %v429 = vld [vmem:[%s428] sm:$0xff]
        %s430 = scalar_lea.vmem %s4, 32
        %v431 = vld [vmem:[%s430] sm:$0xff]
        %v433 = vsel %vm326, %v429, 0
        %435 = vmatpush.msra.mxu0 0.0
        %436 = vmatpush.msra.mxu0 0.0
        %437 = vmatpush.msra.mxu0 0.0
        %438 = vmatpush.msra.mxu0 0.0
        %439 = vmatpush.msra.mxu0 0.0
        %440 = vmatpush.msra.mxu0 0.0
        %441 = vmatpush.msra.mxu0 0.0
        %442 = vmatpush.msra.mxu0 0.0
        %443 = vmatpush.msra.mxu0 0.0
        %444 = vmatpush.msra.mxu0 0.0
        %445 = vmatpush.msra.mxu0 0.0
        %446 = vmatpush.msra.mxu0 0.0
        %447 = vmatpush.msra.mxu0 0.0
        %448 = vmatpush.msra.mxu0 0.0
        %449 = vmatpush.msra.mxu0 0.0
        %450 = vmatpush.msra.mxu0 %v431
        %451 = vmatmul.f32.gmra.mxu0 %v433
        %v452 = vpop.f32.mrf.mxu0
        %v453 = vadd.f32 0.0, %v452
        %454 = vdwg.mxu0
        %v455 = vadd.f32 %v427, %v453
        %v456 = vld [vmem:[%s400 + $0x1] sm:$0xff]
        %s457 = scalar_lea.vmem %s4, 40
        %v458 = vld [vmem:[%s457] sm:$0xff]
        %v460 = vsel %vm326, %v456, 0
        %462 = vmatpush.msra.mxu0 0.0
        %463 = vmatpush.msra.mxu0 0.0
        %464 = vmatpush.msra.mxu0 0.0
        %465 = vmatpush.msra.mxu0 0.0
        %466 = vmatpush.msra.mxu0 0.0
        %467 = vmatpush.msra.mxu0 0.0
        %468 = vmatpush.msra.mxu0 0.0
        %469 = vmatpush.msra.mxu0 0.0
        %470 = vmatpush.msra.mxu0 0.0
        %471 = vmatpush.msra.mxu0 0.0
        %472 = vmatpush.msra.mxu0 0.0
        %473 = vmatpush.msra.mxu0 0.0
        %474 = vmatpush.msra.mxu0 0.0
        %475 = vmatpush.msra.mxu0 0.0
        %476 = vmatpush.msra.mxu0 0.0
        %477 = vmatpush.msra.mxu0 %v458
        %478 = vmatmul.f32.gmra.mxu0 %v460
        %v479 = vpop.f32.mrf.mxu0
        %v480 = vadd.f32 0.0, %v479
        %481 = vdwg.mxu0
        %v482 = vadd.f32 %v455, %v480
        %s483 = sadd.s32 %s313, 1
        %s484 = smul.u32 %s483, 16
        %s485 = scalar_lea.vmem %s291, %s484
        %v486 = vld [vmem:[%s485] sm:$0xff]
        %s487 = scalar_lea.vmem %s4, 48
        %v488 = vld [vmem:[%s487] sm:$0xff]
        %v490 = vsel %vm326, %v486, 0
        %492 = vmatpush.msra.mxu0 0.0
        %493 = vmatpush.msra.mxu0 0.0
        %494 = vmatpush.msra.mxu0 0.0
        %495 = vmatpush.msra.mxu0 0.0
        %496 = vmatpush.msra.mxu0 0.0
        %497 = vmatpush.msra.mxu0 0.0
        %498 = vmatpush.msra.mxu0 0.0
        %499 = vmatpush.msra.mxu0 0.0
        %500 = vmatpush.msra.mxu0 0.0
        %501 = vmatpush.msra.mxu0 0.0
        %502 = vmatpush.msra.mxu0 0.0
        %503 = vmatpush.msra.mxu0 0.0
        %504 = vmatpush.msra.mxu0 0.0
        %505 = vmatpush.msra.mxu0 0.0
        %506 = vmatpush.msra.mxu0 0.0
        %507 = vmatpush.msra.mxu0 %v488
        %508 = vmatmul.f32.gmra.mxu0 %v490
        %v509 = vpop.f32.mrf.mxu0
        %v510 = vadd.f32 0.0, %v509
        %511 = vdwg.mxu0
        %v512 = vadd.f32 %v482, %v510
        %s513 = scalar_lea.vmem %s296, %s484
        %v514 = vld [vmem:[%s513] sm:$0xff]
        %s515 = scalar_lea.vmem %s4, 56
        %v516 = vld [vmem:[%s515] sm:$0xff]
        %v518 = vsel %vm326, %v514, 0
        %520 = vmatpush.msra.mxu0 0.0
        %521 = vmatpush.msra.mxu0 0.0
        %522 = vmatpush.msra.mxu0 0.0
        %523 = vmatpush.msra.mxu0 0.0
        %524 = vmatpush.msra.mxu0 0.0
        %525 = vmatpush.msra.mxu0 0.0
        %526 = vmatpush.msra.mxu0 0.0
        %527 = vmatpush.msra.mxu0 0.0
        %528 = vmatpush.msra.mxu0 0.0
        %529 = vmatpush.msra.mxu0 0.0
        %530 = vmatpush.msra.mxu0 0.0
        %531 = vmatpush.msra.mxu0 0.0
        %532 = vmatpush.msra.mxu0 0.0
        %533 = vmatpush.msra.mxu0 0.0
        %534 = vmatpush.msra.mxu0 0.0
        %535 = vmatpush.msra.mxu0 %v516
        %536 = vmatmul.f32.gmra.mxu0 %v518
        %v537 = vpop.f32.mrf.mxu0
        %v538 = vadd.f32 0.0, %v537
        %539 = vdwg.mxu0
        %v540 = vadd.f32 %v512, %v538
        %v541 = vld [vmem:[%s485 + $0x1] sm:$0xff]
        %s542 = scalar_lea.vmem %s4, 64
        %v543 = vld [vmem:[%s542] sm:$0xff]
        %v545 = vsel %vm326, %v541, 0
        %547 = vmatpush.msra.mxu0 0.0
        %548 = vmatpush.msra.mxu0 0.0
        %549 = vmatpush.msra.mxu0 0.0
        %550 = vmatpush.msra.mxu0 0.0
        %551 = vmatpush.msra.mxu0 0.0
        %552 = vmatpush.msra.mxu0 0.0
        %553 = vmatpush.msra.mxu0 0.0
        %554 = vmatpush.msra.mxu0 0.0
        %555 = vmatpush.msra.mxu0 0.0
        %556 = vmatpush.msra.mxu0 0.0
        %557 = vmatpush.msra.mxu0 0.0
        %558 = vmatpush.msra.mxu0 0.0
        %559 = vmatpush.msra.mxu0 0.0
        %560 = vmatpush.msra.mxu0 0.0
        %561 = vmatpush.msra.mxu0 0.0
        %562 = vmatpush.msra.mxu0 %v543
        %563 = vmatmul.f32.gmra.mxu0 %v545
        %v564 = vpop.f32.mrf.mxu0
        %v565 = vadd.f32 0.0, %v564
        %566 = vdwg.mxu0
        %v567 = vadd.f32 %v540, %v565
        %v568 = vld [vmem:[%s5] sm:$0x1]
        %v570 = vperm.slane %v568, 0
        %v572 = vadd.f32 %v567, %v570
        %v573 = vmax.f32 %v572, 0.0
        %s574 = smul.u32 %s313, 8
        %s575 = scalar_lea.vmem %s311, %s574
        %576 = vst [vmem:[%s575] sm:$0xff] %v573
      $region49: #{encoder_features.1} parent=43 // loop_footer
        %s317 = sadd.s32 1, %s313
      $region50: #{encoder_features.1} parent=43 // loop_footer_branch
        %312 = sbr.rel target = $region46
      $region51: #{encoder_features.1} parent=43 // loop_exit
        _
      %p577 = scmp.lt.s32.totalorder %s17, 1
      %s578 = scalar_select %p577, %s17, 1
      %s579 = smul.addr %s578, 8
      %s580 = smul.addr %s579, 8
      %s581 = scalar_lea.vmem %s6, %s580
      // Predicated region
      $region52: #{encoder_features.1} parent=43 // pred_check
        %p582 = pneg %p181
      $region53: #{encoder_features.1} parent=43 // pred_check_branch
        %584 = sbr.rel (%p582) target = $region55
      $region54: #{encoder_features.1} parent=43 // pred_region
        _
      $region55: #{encoder_features.1} parent=43 // pred_fallthru
        _
    $region44: #{encoder_features.1} parent=5 // pred_fallthru
      _
    %p585 = scmp.le.s32.totalorder 2, %s12
    // Predicated region
    $region56: #{encoder_features.1} parent=5 // pred_check
      %p586 = pneg %p585
    $region57: #{encoder_features.1} parent=5 // pred_check_branch
      %588 = sbr.rel (%p586) target = $region59
    $region58: #{encoder_features.1} parent=5 // pred_region
      %s589 = ssub.s32 %s12, 2
      // Predicated region
      $region60: #{encoder_features.1} parent=58 // pred_check
        %p590 = pneg %p187
      $region61: #{encoder_features.1} parent=58 // pred_check_branch
        %592 = sbr.rel (%p590) target = $region63
      $region62: #{encoder_features.1} parent=58 // pred_region
        %p593 = scmp.lt.s32.totalorder %s18, 1
        %s594 = scalar_select %p593, %s18, 1
        %s595 = smul.addr %s594, 8
        %s596 = smul.addr %s595, 8
        %s597 = scalar_lea.vmem %s6, %s596
      $region63: #{encoder_features.1} parent=58 // pred_fallthru
        _
    $region59: #{encoder_features.1} parent=5 // pred_fallthru
      _
  $region6: #{encoder_features.1} parent=0 // loop_footer
    %s16 = sadd.s32 1, %s12
  $region7: #{encoder_features.1} parent=0 // loop_footer_branch
    %11 = sbr.rel target = $region3
  $region8: #{encoder_features.1} parent=0 // loop_exit
    _

</llo_original>
